<compile_context>
chip_gen: v7x
topology: tpu7x:2x2x1
jax: 0.10.0
libtpu: 0.0.40
codegen_flags: <defaults>
</compile_context>

<pallas_src>
import functools
import math

import jax
import jax.numpy as jnp
from jax import lax
from jax.experimental import pallas as pl
from jax.experimental.pallas import tpu as pltpu


_INV_SQRT2 = 1.0 / math.sqrt(2.0)
_SQRT_2_OVER_PI = math.sqrt(2.0 / math.pi)


def _gelu(x, approximate):
    if approximate:
        # tanh-GELU: one EUP push per element (+ a few VALU muls); ~1e-3 vs exact erf.
        return 0.5 * x * (1.0 + jnp.tanh(_SQRT_2_OVER_PI * (x + 0.044715 * x * x * x)))
    # Matches torch.nn.GELU() default (approximate='none'): 0.5*x*(1+erf(x/sqrt(2)))
    return 0.5 * x * (1.0 + lax.erf(x * _INV_SQRT2))


def _ltam_kernel(x_ref,
                 w1_ref, b1_ref,
                 w2_ref, b2_ref,
                 w3_ref, b3_ref,
                 w4_ref, b4_ref,
                 o_ref, *, approximate_gelu):
    mxu_dtype = w1_ref.dtype  # bf16 or f32; accumulation is always f32

    # Hoist bias loads: read once at entry, keep in f32.
    b1 = b1_ref[...].astype(jnp.float32)
    b2 = b2_ref[...].astype(jnp.float32)
    b3 = b3_ref[...].astype(jnp.float32)
    b4 = b4_ref[...].astype(jnp.float32)

    x = x_ref[...].astype(mxu_dtype)

    h = jnp.dot(x, w1_ref[...], preferred_element_type=jnp.float32) + b1
    h = _gelu(h, approximate_gelu)
    h = jnp.dot(h.astype(mxu_dtype), w2_ref[...],
                preferred_element_type=jnp.float32) + b2
    h = _gelu(h, approximate_gelu)
    h = jnp.dot(h.astype(mxu_dtype), w3_ref[...],
                preferred_element_type=jnp.float32) + b3
    h = _gelu(h, approximate_gelu)
    h = jnp.dot(h.astype(mxu_dtype), w4_ref[...],
                preferred_element_type=jnp.float32) + b4

    o_ref[...] = jax.nn.sigmoid(h).astype(o_ref.dtype)


def _round_up(v, m):
    return ((v + m - 1) // m) * m


def _block_diag(w, p):
    """blkdiag(w, ..., w) with p copies; [din, dout] -> [p*din, p*dout]."""
    din, dout = w.shape
    out = jnp.zeros((p * din, p * dout), w.dtype)
    for i in range(p):
        out = out.at[i * din:(i + 1) * din, i * dout:(i + 1) * dout].set(w)
    return out


def _default_pack():
    """Pack factor: 8 (256-wide block-diag weights match the 2x256^2 MXU on v6e/v7x),
    4 on older 128x128-MXU chips (v5e and earlier)."""
    try:
        kind = jax.devices()[0].device_kind.lower()
    except Exception:
        return 4
    if any(tag in kind for tag in ("v2", "v3", "v4", "v5")):
        return 4
    return 8


@functools.partial(jax.jit,
                   static_argnames=("batch_tile", "approximate_gelu", "pack", "mxu_dtype"))
def ltam_controller_v1(x, params, *, batch_tile=1024, approximate_gelu=True,
                       pack=None, mxu_dtype=jnp.bfloat16):
    """x: [B, input_size]; params: dict of (already-transposed) weights & biases.

    approximate_gelu=True  -> tanh GELU (EUP path, performance default).
    approximate_gelu=False -> exact erf GELU (torch.nn.GELU() parity).
    mxu_dtype              -> dtype fed to the MXU (bf16 default, f32 accumulation).
    """
    B, d_in = x.shape
    out_dtype = x.dtype
    w1_t = params["w1"]                      # [d_in, H]
    H = w1_t.shape[1]
    d_out = params["w4"].shape[1]

    if pack is None:
        pack = _default_pack()
    pack = max(1, int(pack))

    # ---- lane packing: P consecutive batch rows per packed row --------------
    pad = (-B) % pack
    if pad:
        x = jnp.concatenate([x, jnp.zeros((pad, d_in), x.dtype)], axis=0)
    b_pad = B + pad
    bp = b_pad // pack                       # packed rows
    in_w, hid_w, out_w = d_in * pack, H * pack, d_out * pack

    xp = x.reshape(bp, in_w).astype(mxu_dtype)   # free row-major view + one cast

    mk_w = lambda w: _block_diag(w.astype(mxu_dtype), pack)
    mk_b = lambda b: jnp.tile(b.reshape(1, -1).astype(jnp.float32), (1, pack))
    w1, b1 = mk_w(params["w1"]), mk_b(params["b1"])
    w2, b2 = mk_w(params["w2"]), mk_b(params["b2"])
    w3, b3 = mk_w(params["w3"]), mk_b(params["b3"])
    w4, b4 = mk_w(params["w4"]), mk_b(params["b4"])

    # ---- batch-tile selection (in packed rows) -------------------------------
    # Large tiles amortize the ~0.35 us per-grid-step overhead; tile is a multiple
    # of 8 (sublane granule). For bigger batches keep >= 2 grid steps so the
    # "parallel" axis can shard across both TensorCores on v7x (near-zero cost on
    # single-TC v5e/v6e).
    cap = max(8, batch_tile // pack)
    if bp <= 8:
        tb = bp                              # block == full dim is allowed
    else:
        tb = max(8, min(cap, (bp // 8) * 8))
        if bp >= 16 and pl.cdiv(bp, tb) < 2:
            tb = max(8, _round_up(pl.cdiv(bp, 2), 8))
    grid = (pl.cdiv(bp, tb),)

    # Weights/biases: whole-array VMEM residents (single copy, no double buffer).
    wspec = pl.BlockSpec(memory_space=pltpu.MemorySpace.VMEM)

    # Advisory cost estimate for the XLA scheduler (packed shapes).
    flops = (2 * bp * (in_w * hid_w + 2 * hid_w * hid_w + hid_w * out_w)
             + 10 * bp * (3 * hid_w + out_w))
    transcendentals = bp * (3 * hid_w + out_w)
    param_bytes = sum(int(a.size) * a.dtype.itemsize
                      for a in (w1, b1, w2, b2, w3, b3, w4, b4))
    bytes_accessed = (int(xp.size) * xp.dtype.itemsize + param_bytes
                      + bp * out_w * jnp.dtype(out_dtype).itemsize)

    kernel = functools.partial(_ltam_kernel, approximate_gelu=approximate_gelu)

    out_p = pl.pallas_call(
        kernel,
        out_shape=jax.ShapeDtypeStruct((bp, out_w), out_dtype),
        grid=grid,
        in_specs=[
            pl.BlockSpec((tb, in_w), lambda i: (i, 0)),   # packed x tile (pipelined)
            wspec, wspec,                                 # mlp1 W, b
            wspec, wspec,                                 # mlp2 W, b
            wspec, wspec,                                 # mlp3 W, b
            wspec, wspec,                                 # mlp4 W, b
        ],
        out_specs=pl.BlockSpec((tb, out_w), lambda i: (i, 0)),
        compiler_params=pltpu.CompilerParams(
            dimension_semantics=("parallel",)),
        cost_estimate=pl.CostEstimate(flops=flops,
                                      transcendentals=transcendentals,
                                      bytes_accessed=bytes_accessed),
    )(xp, w1, b1, w2, b2, w3, b3, w4, b4)

    out = out_p.reshape(b_pad, d_out)        # free view back to [B_pad, d_out]
    return out[:B] if pad else out


def _init_linear(key, fan_in, fan_out):
    """Deterministic PyTorch-style Linear init; returns (W^T [in,out], b [1,out])."""
    kw, kb = jax.random.split(key)
    bound = 1.0 / math.sqrt(fan_in)
    w = jax.random.uniform(kw, (fan_out, fan_in), jnp.float32, -bound, bound)
    b = jax.random.uniform(kb, (fan_out,), jnp.float32, -bound, bound)
    return w.T, b.reshape(1, fan_out)


def make_params(key, input_size, output_size, hidden_size):
    k1, k2, k3, k4 = jax.random.split(key, 4)
    w1, b1 = _init_linear(k1, input_size, hidden_size)
    w2, b2 = _init_linear(k2, hidden_size, hidden_size)
    w3, b3 = _init_linear(k3, hidden_size, hidden_size)
    w4, b4 = _init_linear(k4, hidden_size, output_size)
    return dict(w1=w1, b1=b1, w2=w2, b2=b2, w3=w3, b3=b3, w4=w4, b4=b4)


def _reference(x, p, approximate):
    g = lambda t: _gelu(t, approximate)
    h = g(x @ p["w1"] + p["b1"].reshape(1, -1))
    h = g(h @ p["w2"] + p["b2"].reshape(1, -1))
    h = g(h @ p["w3"] + p["b3"].reshape(1, -1))
    return jax.nn.sigmoid(h @ p["w4"] + p["b4"].reshape(1, -1))


if __name__ == "__main__":
    input_size, hidden_size, output_size = 32, 32, 16

    key = jax.random.PRNGKey(0)
    k_params, k_x1, k_x2 = jax.random.split(key, 3)
    params = make_params(k_params, input_size, output_size, hidden_size)

    # 1) Strict torch parity: exact-erf GELU, f32 MXU operands, small batch.
    x_small = jax.random.normal(k_x1, (8, input_size), jnp.float32)
    out_small = jax.block_until_ready(
        ltam_controller_v1(x_small, params,
                           approximate_gelu=False, mxu_dtype=jnp.float32))
    ref_small = _reference(x_small, params, approximate=False)
    assert out_small.shape == (8, output_size)
    assert jnp.allclose(out_small, ref_small, rtol=1e-4, atol=1e-5), "f32/erf mismatch"

    # 2) Performance defaults: tanh GELU (EUP), bf16 MXU operands, lane packing with
    #    a batch that is not a multiple of the pack factor (exercises pad + clip),
    #    multi-step "parallel" grid.
    x_big = jax.random.normal(k_x2, (500, input_size), jnp.float32)
    out_big = jax.block_until_ready(ltam_controller_v1(x_big, params))
    ref_big = _reference(x_big, params, approximate=True)
    assert out_big.shape == (500, output_size)
    assert jnp.allclose(out_big, ref_big, rtol=2e-2, atol=2e-2), "bf16/tanh mismatch"

    print("KERNEL_OK")
</pallas_src>

<mosaic_0001>
module attributes {stable_mosaic.version = 11 : i64} {
  func.func @_ltam_kernel(%arg0: i32, %arg1: memref<1x256xf32, #tpu.memory_space<vmem>>, %arg2: memref<256x256xf32, #tpu.memory_space<vmem>>, %arg3: memref<1x256xf32, #tpu.memory_space<vmem>>, %arg4: memref<256x256xf32, #tpu.memory_space<vmem>>, %arg5: memref<1x256xf32, #tpu.memory_space<vmem>>, %arg6: memref<256x256xf32, #tpu.memory_space<vmem>>, %arg7: memref<1x256xf32, #tpu.memory_space<vmem>>, %arg8: memref<256x128xf32, #tpu.memory_space<vmem>>, %arg9: memref<1x128xf32, #tpu.memory_space<vmem>>, %arg10: memref<1x128xf32, #tpu.memory_space<vmem>>) attributes {dimension_semantics = [#tpu.dimension_semantics<parallel>], iteration_bounds = array<i64: 1>, scalar_prefetch = 0 : i64, scratch_operands = 0 : i64, tpu.core_type = #tpu.core_type<tc>, window_params = [{transform_indices = @transform_0, window_bounds = array<i64: 1, 256>}, {pipeline_mode = #tpu.pipeline_mode<synchronous>, transform_indices = @transform_1, window_bounds = array<i64: 256, 256>}, {pipeline_mode = #tpu.pipeline_mode<synchronous>, transform_indices = @transform_2, window_bounds = array<i64: 1, 256>}, {pipeline_mode = #tpu.pipeline_mode<synchronous>, transform_indices = @transform_3, window_bounds = array<i64: 256, 256>}, {pipeline_mode = #tpu.pipeline_mode<synchronous>, transform_indices = @transform_4, window_bounds = array<i64: 1, 256>}, {pipeline_mode = #tpu.pipeline_mode<synchronous>, transform_indices = @transform_5, window_bounds = array<i64: 256, 256>}, {pipeline_mode = #tpu.pipeline_mode<synchronous>, transform_indices = @transform_6, window_bounds = array<i64: 1, 256>}, {pipeline_mode = #tpu.pipeline_mode<synchronous>, transform_indices = @transform_7, window_bounds = array<i64: 256, 128>}, {pipeline_mode = #tpu.pipeline_mode<synchronous>, transform_indices = @transform_8, window_bounds = array<i64: 1, 128>}, {transform_indices = @transform_9, window_bounds = array<i64: 1, 128>}]} {
    %c0 = arith.constant 0 : index
    %c0_0 = arith.constant 0 : index
    %0 = vector.load %arg3[%c0, %c0_0] : memref<1x256xf32, #tpu.memory_space<vmem>>, vector<1x256xf32>
    %c0_1 = arith.constant 0 : index
    %c0_2 = arith.constant 0 : index
    %1 = vector.load %arg5[%c0_1, %c0_2] : memref<1x256xf32, #tpu.memory_space<vmem>>, vector<1x256xf32>
    %c0_3 = arith.constant 0 : index
    %c0_4 = arith.constant 0 : index
    %2 = vector.load %arg7[%c0_3, %c0_4] : memref<1x256xf32, #tpu.memory_space<vmem>>, vector<1x256xf32>
    %c0_5 = arith.constant 0 : index
    %c0_6 = arith.constant 0 : index
    %3 = vector.load %arg9[%c0_5, %c0_6] : memref<1x128xf32, #tpu.memory_space<vmem>>, vector<1x128xf32>
    %c0_7 = arith.constant 0 : index
    %c0_8 = arith.constant 0 : index
    %4 = vector.load %arg1[%c0_7, %c0_8] : memref<1x256xf32, #tpu.memory_space<vmem>>, vector<1x256xf32>
    %c0_9 = arith.constant 0 : index
    %c0_10 = arith.constant 0 : index
    %5 = vector.load %arg2[%c0_9, %c0_10] : memref<256x256xf32, #tpu.memory_space<vmem>>, vector<256x256xf32>
    %cst = arith.constant dense<0.000000e+00> : vector<1x256xf32>
    %6 = tpu.matmul %4, %5, %cst {dimension_numbers = #tpu.dot_dimension_numbers<[1], [0], [0], [1], [0, 0, 1, 1], [], []>} : vector<1x256xf32>, vector<256x256xf32>, vector<1x256xf32> -> vector<1x256xf32>
    %7 = arith.addf %6, %0 : vector<1x256xf32>
    %cst_11 = arith.constant 5.000000e-01 : f32
    %8 = vector.broadcast %cst_11 : f32 to vector<1x256xf32>
    %9 = arith.mulf %8, %7 : vector<1x256xf32>
    %cst_12 = arith.constant 0.707106769 : f32
    %10 = vector.broadcast %cst_12 : f32 to vector<1x256xf32>
    %11 = arith.mulf %7, %10 : vector<1x256xf32>
    %12 = math.erf %11 : vector<1x256xf32>
    %cst_13 = arith.constant 1.000000e+00 : f32
    %13 = vector.broadcast %cst_13 : f32 to vector<1x256xf32>
    %14 = arith.addf %13, %12 : vector<1x256xf32>
    %15 = arith.mulf %9, %14 : vector<1x256xf32>
    %c0_14 = arith.constant 0 : index
    %c0_15 = arith.constant 0 : index
    %16 = vector.load %arg4[%c0_14, %c0_15] : memref<256x256xf32, #tpu.memory_space<vmem>>, vector<256x256xf32>
    %cst_16 = arith.constant dense<0.000000e+00> : vector<1x256xf32>
    %17 = tpu.matmul %15, %16, %cst_16 {dimension_numbers = #tpu.dot_dimension_numbers<[1], [0], [0], [1], [0, 0, 1, 1], [], []>} : vector<1x256xf32>, vector<256x256xf32>, vector<1x256xf32> -> vector<1x256xf32>
    %18 = arith.addf %17, %1 : vector<1x256xf32>
    %cst_17 = arith.constant 5.000000e-01 : f32
    %19 = vector.broadcast %cst_17 : f32 to vector<1x256xf32>
    %20 = arith.mulf %19, %18 : vector<1x256xf32>
    %cst_18 = arith.constant 0.707106769 : f32
    %21 = vector.broadcast %cst_18 : f32 to vector<1x256xf32>
    %22 = arith.mulf %18, %21 : vector<1x256xf32>
    %23 = math.erf %22 : vector<1x256xf32>
    %cst_19 = arith.constant 1.000000e+00 : f32
    %24 = vector.broadcast %cst_19 : f32 to vector<1x256xf32>
    %25 = arith.addf %24, %23 : vector<1x256xf32>
    %26 = arith.mulf %20, %25 : vector<1x256xf32>
    %c0_20 = arith.constant 0 : index
    %c0_21 = arith.constant 0 : index
    %27 = vector.load %arg6[%c0_20, %c0_21] : memref<256x256xf32, #tpu.memory_space<vmem>>, vector<256x256xf32>
    %cst_22 = arith.constant dense<0.000000e+00> : vector<1x256xf32>
    %28 = tpu.matmul %26, %27, %cst_22 {dimension_numbers = #tpu.dot_dimension_numbers<[1], [0], [0], [1], [0, 0, 1, 1], [], []>} : vector<1x256xf32>, vector<256x256xf32>, vector<1x256xf32> -> vector<1x256xf32>
    %29 = arith.addf %28, %2 : vector<1x256xf32>
    %cst_23 = arith.constant 5.000000e-01 : f32
    %30 = vector.broadcast %cst_23 : f32 to vector<1x256xf32>
    %31 = arith.mulf %30, %29 : vector<1x256xf32>
    %cst_24 = arith.constant 0.707106769 : f32
    %32 = vector.broadcast %cst_24 : f32 to vector<1x256xf32>
    %33 = arith.mulf %29, %32 : vector<1x256xf32>
    %34 = math.erf %33 : vector<1x256xf32>
    %cst_25 = arith.constant 1.000000e+00 : f32
    %35 = vector.broadcast %cst_25 : f32 to vector<1x256xf32>
    %36 = arith.addf %35, %34 : vector<1x256xf32>
    %37 = arith.mulf %31, %36 : vector<1x256xf32>
    %c0_26 = arith.constant 0 : index
    %c0_27 = arith.constant 0 : index
    %38 = vector.load %arg8[%c0_26, %c0_27] : memref<256x128xf32, #tpu.memory_space<vmem>>, vector<256x128xf32>
    %cst_28 = arith.constant dense<0.000000e+00> : vector<1x128xf32>
    %39 = tpu.matmul %37, %38, %cst_28 {dimension_numbers = #tpu.dot_dimension_numbers<[1], [0], [0], [1], [0, 0, 1, 1], [], []>} : vector<1x256xf32>, vector<256x128xf32>, vector<1x128xf32> -> vector<1x128xf32>
    %40 = arith.addf %39, %3 : vector<1x128xf32>
    %41 = arith.negf %40 : vector<1x128xf32>
    %42 = math.exp %41 : vector<1x128xf32>
    %cst_29 = arith.constant 1.000000e+00 : f32
    %43 = vector.broadcast %cst_29 : f32 to vector<1x128xf32>
    %44 = arith.addf %43, %42 : vector<1x128xf32>
    %45 = arith.divf %43, %44 : vector<1x128xf32>
    %c0_30 = arith.constant 0 : index
    %c0_31 = arith.constant 0 : index
    %46 = vector.load %arg10[%c0_30, %c0_31] : memref<1x128xf32, #tpu.memory_space<vmem>>, vector<1x128xf32>
    tpu.vector_store %arg10[%c0_30, %c0_31], %45 {strides = array<i32>} : memref<1x128xf32, #tpu.memory_space<vmem>>, vector<1x128xf32>,
    return
  }
  func.func @transform_0(%arg0: i32) -> (i32, i32) {
    %c0_i32 = arith.constant 0 : i32
    %c0_i32_0 = arith.constant 0 : i32
    return %arg0, %c0_i32 : i32, i32
  }
  func.func @transform_1(%arg0: i32) -> (i32, i32) {
    %c0_i32 = arith.constant 0 : i32
    %c0_i32_0 = arith.constant 0 : i32
    %c0_i32_1 = arith.constant 0 : i32
    return %c0_i32, %c0_i32_0 : i32, i32
  }
  func.func @transform_2(%arg0: i32) -> (i32, i32) {
    %c0_i32 = arith.constant 0 : i32
    %c0_i32_0 = arith.constant 0 : i32
    %c0_i32_1 = arith.constant 0 : i32
    return %c0_i32, %c0_i32_0 : i32, i32
  }
  func.func @transform_3(%arg0: i32) -> (i32, i32) {
    %c0_i32 = arith.constant 0 : i32
    %c0_i32_0 = arith.constant 0 : i32
    %c0_i32_1 = arith.constant 0 : i32
    return %c0_i32, %c0_i32_0 : i32, i32
  }
  func.func @transform_4(%arg0: i32) -> (i32, i32) {
    %c0_i32 = arith.constant 0 : i32
    %c0_i32_0 = arith.constant 0 : i32
    %c0_i32_1 = arith.constant 0 : i32
    return %c0_i32, %c0_i32_0 : i32, i32
  }
  func.func @transform_5(%arg0: i32) -> (i32, i32) {
    %c0_i32 = arith.constant 0 : i32
    %c0_i32_0 = arith.constant 0 : i32
    %c0_i32_1 = arith.constant 0 : i32
    return %c0_i32, %c0_i32_0 : i32, i32
  }
  func.func @transform_6(%arg0: i32) -> (i32, i32) {
    %c0_i32 = arith.constant 0 : i32
    %c0_i32_0 = arith.constant 0 : i32
    %c0_i32_1 = arith.constant 0 : i32
    return %c0_i32, %c0_i32_0 : i32, i32
  }
  func.func @transform_7(%arg0: i32) -> (i32, i32) {
    %c0_i32 = arith.constant 0 : i32
    %c0_i32_0 = arith.constant 0 : i32
    %c0_i32_1 = arith.constant 0 : i32
    return %c0_i32, %c0_i32_0 : i32, i32
  }
  func.func @transform_8(%arg0: i32) -> (i32, i32) {
    %c0_i32 = arith.constant 0 : i32
    %c0_i32_0 = arith.constant 0 : i32
    %c0_i32_1 = arith.constant 0 : i32
    return %c0_i32, %c0_i32_0 : i32, i32
  }
  func.func @transform_9(%arg0: i32) -> (i32, i32) {
    %c0_i32 = arith.constant 0 : i32
    %c0_i32_0 = arith.constant 0 : i32
    return %arg0, %c0_i32 : i32, i32
  }
}

</mosaic_0001>

<llo_original>
// kernel: ltam_controller_v1.1
$region0: #{ltam_controller_v1.1}
  #allocation0 [shape = 'u32[]', space=smem, size = 0x4, offset = 0x4, fixed_abs, tag = 'smem constant byte address 0x4 - core index']
  #allocation1 [shape = 'u32[144,128]{1,0:T(1,128)}', space=vmem, size = 0x12000, scoped, tag = 'internal scratch']
  %s0 = inlined_call_operand.vmem [shape: f32[1,256], index: 0, kind: input, shape index: {}]
  %s1 = inlined_call_operand.vmem [shape: f32[256,256], index: 1, kind: input, shape index: {}]
  %s2 = inlined_call_operand.vmem [shape: f32[1,256], index: 2, kind: input, shape index: {}]
  %s3 = inlined_call_operand.vmem [shape: f32[256,256], index: 3, kind: input, shape index: {}]
  %s4 = inlined_call_operand.vmem [shape: f32[1,256], index: 4, kind: input, shape index: {}]
  %s5 = inlined_call_operand.vmem [shape: f32[256,256], index: 5, kind: input, shape index: {}]
  %s6 = inlined_call_operand.vmem [shape: f32[1,256], index: 6, kind: input, shape index: {}]
  %s7 = inlined_call_operand.vmem [shape: f32[256,128], index: 7, kind: input, shape index: {}]
  %s8 = inlined_call_operand.vmem [shape: f32[1,128], index: 8, kind: input, shape index: {}]
  %s9 = inlined_call_operand.vmem [shape: f32[1,128], index: 9, kind: output, shape index: {}]
  %s10 = sld [smem:[#allocation0]]
  $region46: #{ltam_controller_v1.1} parent=0
    _
  %s12 = ssub.s32 1, %s10
  %s13 = scalar_select 0, %s12, %s10
  // Predicated region
  $region2: #{ltam_controller_v1.1} parent=0 // pred_check
    _
  $region3: #{ltam_controller_v1.1} parent=0 // pred_check_branch
    %15 = sbr.rel (0) target = $region5
  $region4: #{ltam_controller_v1.1} parent=0 // pred_region
    _
  $region5: #{ltam_controller_v1.1} parent=0 // pred_fallthru
    _
  // Predicated region
  $region6: #{ltam_controller_v1.1} parent=0 // pred_check
    _
  $region7: #{ltam_controller_v1.1} parent=0 // pred_check_branch
    %17 = sbr.rel (0) target = $region9
  $region8: #{ltam_controller_v1.1} parent=0 // pred_region
    _
  $region9: #{ltam_controller_v1.1} parent=0 // pred_fallthru
    _
  // Predicated region
  $region10: #{ltam_controller_v1.1} parent=0 // pred_check
    _
  $region11: #{ltam_controller_v1.1} parent=0 // pred_check_branch
    %19 = sbr.rel (0) target = $region13
  $region12: #{ltam_controller_v1.1} parent=0 // pred_region
    _
  $region13: #{ltam_controller_v1.1} parent=0 // pred_fallthru
    _
  // Predicated region
  $region14: #{ltam_controller_v1.1} parent=0 // pred_check
    _
  $region15: #{ltam_controller_v1.1} parent=0 // pred_check_branch
    %21 = sbr.rel (0) target = $region17
  $region16: #{ltam_controller_v1.1} parent=0 // pred_region
    _
  $region17: #{ltam_controller_v1.1} parent=0 // pred_fallthru
    _
  // Predicated region
  $region18: #{ltam_controller_v1.1} parent=0 // pred_check
    _
  $region19: #{ltam_controller_v1.1} parent=0 // pred_check_branch
    %23 = sbr.rel (0) target = $region21
  $region20: #{ltam_controller_v1.1} parent=0 // pred_region
    _
  $region21: #{ltam_controller_v1.1} parent=0 // pred_fallthru
    _
  // Predicated region
  $region22: #{ltam_controller_v1.1} parent=0 // pred_check
    _
  $region23: #{ltam_controller_v1.1} parent=0 // pred_check_branch
    %25 = sbr.rel (0) target = $region25
  $region24: #{ltam_controller_v1.1} parent=0 // pred_region
    _
  $region25: #{ltam_controller_v1.1} parent=0 // pred_fallthru
    _
  // Predicated region
  $region26: #{ltam_controller_v1.1} parent=0 // pred_check
    _
  $region27: #{ltam_controller_v1.1} parent=0 // pred_check_branch
    %27 = sbr.rel (0) target = $region29
  $region28: #{ltam_controller_v1.1} parent=0 // pred_region
    _
  $region29: #{ltam_controller_v1.1} parent=0 // pred_fallthru
    _
  // Predicated region
  $region30: #{ltam_controller_v1.1} parent=0 // pred_check
    _
  $region31: #{ltam_controller_v1.1} parent=0 // pred_check_branch
    %29 = sbr.rel (0) target = $region33
  $region32: #{ltam_controller_v1.1} parent=0 // pred_region
    _
  $region33: #{ltam_controller_v1.1} parent=0 // pred_fallthru
    _
  // Predicated region
  $region34: #{ltam_controller_v1.1} parent=0 // pred_check
    _
  $region35: #{ltam_controller_v1.1} parent=0 // pred_check_branch
    %31 = sbr.rel (0) target = $region37
  $region36: #{ltam_controller_v1.1} parent=0 // pred_region
    _
  $region37: #{ltam_controller_v1.1} parent=0 // pred_fallthru
    _
  %v32 = vld [vmem:[%s2] sm:$0x3]
  %v33 = vld [vmem:[%s4] sm:$0x3]
  %v34 = vld [vmem:[%s6] sm:$0x3]
  %v35 = vld [vmem:[%s8] sm:$0x1]
  %v36 = vld [vmem:[%s0] sm:$0x3]
  %v37 = vld [vmem:[%s1] sm:$0xff]
  %v38 = vld [vmem:[%s1 + $0x8] sm:$0xff]
  %v39 = vld [vmem:[%s1 + $0x10] sm:$0xff]
  %v40 = vld [vmem:[%s1 + $0x18] sm:$0xff]
  %v41 = vld [vmem:[%s1 + $0x20] sm:$0xff]
  %v42 = vld [vmem:[%s1 + $0x28] sm:$0xff]
  %v43 = vld [vmem:[%s1 + $0x30] sm:$0xff]
  %v44 = vld [vmem:[%s1 + $0x38] sm:$0xff]
  %v45 = vld [vmem:[%s1 + $0x40] sm:$0xff]
  %v46 = vld [vmem:[%s1 + $0x48] sm:$0xff]
  %v47 = vld [vmem:[%s1 + $0x50] sm:$0xff]
  %v48 = vld [vmem:[%s1 + $0x58] sm:$0xff]
  %v49 = vld [vmem:[%s1 + $0x60] sm:$0xff]
  %v50 = vld [vmem:[%s1 + $0x68] sm:$0xff]
  %v51 = vld [vmem:[%s1 + $0x70] sm:$0xff]
  %v52 = vld [vmem:[%s1 + $0x78] sm:$0xff]
  %v53 = vld [vmem:[%s1 + $0x80] sm:$0xff]
  %v54 = vld [vmem:[%s1 + $0x88] sm:$0xff]
  %v55 = vld [vmem:[%s1 + $0x90] sm:$0xff]
  %v56 = vld [vmem:[%s1 + $0x98] sm:$0xff]
  %v57 = vld [vmem:[%s1 + $0xa0] sm:$0xff]
  %v58 = vld [vmem:[%s1 + $0xa8] sm:$0xff]
  %v59 = vld [vmem:[%s1 + $0xb0] sm:$0xff]
  %v60 = vld [vmem:[%s1 + $0xb8] sm:$0xff]
  %v61 = vld [vmem:[%s1 + $0xc0] sm:$0xff]
  %v62 = vld [vmem:[%s1 + $0xc8] sm:$0xff]
  %v63 = vld [vmem:[%s1 + $0xd0] sm:$0xff]
  %v64 = vld [vmem:[%s1 + $0xd8] sm:$0xff]
  %v65 = vld [vmem:[%s1 + $0xe0] sm:$0xff]
  %v66 = vld [vmem:[%s1 + $0xe8] sm:$0xff]
  %v67 = vld [vmem:[%s1 + $0xf0] sm:$0xff]
  %v68 = vld [vmem:[%s1 + $0xf8] sm:$0xff]
  %v69 = vld [vmem:[%s1 + $0x100] sm:$0xff]
  %v70 = vld [vmem:[%s1 + $0x108] sm:$0xff]
  %v71 = vld [vmem:[%s1 + $0x110] sm:$0xff]
  %v72 = vld [vmem:[%s1 + $0x118] sm:$0xff]
  %v73 = vld [vmem:[%s1 + $0x120] sm:$0xff]
  %v74 = vld [vmem:[%s1 + $0x128] sm:$0xff]
  %v75 = vld [vmem:[%s1 + $0x130] sm:$0xff]
  %v76 = vld [vmem:[%s1 + $0x138] sm:$0xff]
  %v77 = vld [vmem:[%s1 + $0x140] sm:$0xff]
  %v78 = vld [vmem:[%s1 + $0x148] sm:$0xff]
  %v79 = vld [vmem:[%s1 + $0x150] sm:$0xff]
  %v80 = vld [vmem:[%s1 + $0x158] sm:$0xff]
  %v81 = vld [vmem:[%s1 + $0x160] sm:$0xff]
  %v82 = vld [vmem:[%s1 + $0x168] sm:$0xff]
  %v83 = vld [vmem:[%s1 + $0x170] sm:$0xff]
  %v84 = vld [vmem:[%s1 + $0x178] sm:$0xff]
  %v85 = vld [vmem:[%s1 + $0x180] sm:$0xff]
  %v86 = vld [vmem:[%s1 + $0x188] sm:$0xff]
  %v87 = vld [vmem:[%s1 + $0x190] sm:$0xff]
  %v88 = vld [vmem:[%s1 + $0x198] sm:$0xff]
  %v89 = vld [vmem:[%s1 + $0x1a0] sm:$0xff]
  %v90 = vld [vmem:[%s1 + $0x1a8] sm:$0xff]
  %v91 = vld [vmem:[%s1 + $0x1b0] sm:$0xff]
  %v92 = vld [vmem:[%s1 + $0x1b8] sm:$0xff]
  %v93 = vld [vmem:[%s1 + $0x1c0] sm:$0xff]
  %v94 = vld [vmem:[%s1 + $0x1c8] sm:$0xff]
  %v95 = vld [vmem:[%s1 + $0x1d0] sm:$0xff]
  %v96 = vld [vmem:[%s1 + $0x1d8] sm:$0xff]
  %v97 = vld [vmem:[%s1 + $0x1e0] sm:$0xff]
  %v98 = vld [vmem:[%s1 + $0x1e8] sm:$0xff]
  %v99 = vld [vmem:[%s1 + $0x1f0] sm:$0xff]
  %v100 = vld [vmem:[%s1 + $0x1f8] sm:$0xff]
  %v102 = vlaneseq
  %v103 = vshrl.u32 %v102, 7
  %v104 = vsub.s32 0, %v103
  %v105 = vrot.slane %v36, %v104
  %v106 = vlaneseq
  %v107 = vshrl.u32 %v106, 7
  %v108 = vsub.s32 1, %v107
  %v109 = vrot.slane %v36, %v108
  %v113 = vlaneseq
  %v114 = vshrl.u32 %v113, 7
  %v115 = vsub.s32 0, %v114
  %v116 = vrot.slane %v32, %v115
  %v117 = vlaneseq
  %v118 = vshrl.u32 %v117, 7
  %v119 = vsub.s32 1, %v118
  %v120 = vrot.slane %v32, %v119
  %123 = vmatprep.subr.mxu0 %v38
  %124 = vmatpush1.msra.mxu0 %v37
  %125 = vmatprep.subr.mxu0 %v40
  %126 = vmatpush1.msra.mxu0 %v39
  %127 = vmatprep.subr.mxu0 %v42
  %128 = vmatpush1.msra.mxu0 %v41
  %129 = vmatprep.subr.mxu0 %v44
  %130 = vmatpush1.msra.mxu0 %v43
  %131 = vmatprep.subr.mxu0 %v46
  %132 = vmatpush1.msra.mxu0 %v45
  %133 = vmatprep.subr.mxu0 %v48
  %134 = vmatpush1.msra.mxu0 %v47
  %135 = vmatprep.subr.mxu0 %v50
  %136 = vmatpush1.msra.mxu0 %v49
  %137 = vmatprep.subr.mxu0 %v52
  %138 = vmatpush1.msra.mxu0 %v51
  %139 = vmatprep.subr.mxu0 %v54
  %140 = vmatpush1.msra.mxu0 %v53
  %141 = vmatprep.subr.mxu0 %v56
  %142 = vmatpush1.msra.mxu0 %v55
  %143 = vmatprep.subr.mxu0 %v58
  %144 = vmatpush1.msra.mxu0 %v57
  %145 = vmatprep.subr.mxu0 %v60
  %146 = vmatpush1.msra.mxu0 %v59
  %147 = vmatprep.subr.mxu0 %v62
  %148 = vmatpush1.msra.mxu0 %v61
  %149 = vmatprep.subr.mxu0 %v64
  %150 = vmatpush1.msra.mxu0 %v63
  %151 = vmatprep.subr.mxu0 %v66
  %152 = vmatpush1.msra.mxu0 %v65
  %153 = vmatprep.subr.mxu0 %v68
  %154 = vmatpush1.msra.mxu0 %v67
  %155 = vmatprep.subr.mxu0 %v70
  %156 = vmatpush1.msra.mxu0 %v69
  %157 = vmatprep.subr.mxu0 %v72
  %158 = vmatpush1.msra.mxu0 %v71
  %159 = vmatprep.subr.mxu0 %v74
  %160 = vmatpush1.msra.mxu0 %v73
  %161 = vmatprep.subr.mxu0 %v76
  %162 = vmatpush1.msra.mxu0 %v75
  %163 = vmatprep.subr.mxu0 %v78
  %164 = vmatpush1.msra.mxu0 %v77
  %165 = vmatprep.subr.mxu0 %v80
  %166 = vmatpush1.msra.mxu0 %v79
  %167 = vmatprep.subr.mxu0 %v82
  %168 = vmatpush1.msra.mxu0 %v81
  %169 = vmatprep.subr.mxu0 %v84
  %170 = vmatpush1.msra.mxu0 %v83
  %171 = vmatprep.subr.mxu0 %v86
  %172 = vmatpush1.msra.mxu0 %v85
  %173 = vmatprep.subr.mxu0 %v88
  %174 = vmatpush1.msra.mxu0 %v87
  %175 = vmatprep.subr.mxu0 %v90
  %176 = vmatpush1.msra.mxu0 %v89
  %177 = vmatprep.subr.mxu0 %v92
  %178 = vmatpush1.msra.mxu0 %v91
  %179 = vmatprep.subr.mxu0 %v94
  %180 = vmatpush1.msra.mxu0 %v93
  %181 = vmatprep.subr.mxu0 %v96
  %182 = vmatpush1.msra.mxu0 %v95
  %183 = vmatprep.subr.mxu0 %v98
  %184 = vmatpush1.msra.mxu0 %v97
  %185 = vmatprep.subr.mxu0 %v100
  %186 = vmatpush1.msra.mxu0 %v99
  %187 = vmatprep.mubr.f32.mxu0 %v109
  %188 = vmatmul.mubr.f32.gmra.mrb[0].mxu0 %v105
  %v189 = vpop.f32.mrb[0].mxu0
  %v190 = vadd.f32 %v116, %v189
  %v191 = vpop.f32.mrb[0].mxu0
  %v192 = vadd.f32 %v120, %v191
  %193 = vdwg.mxu0
  %v194 = vmul.f32 %v190, 0.5
  %v195 = vmul.f32 %v192, 0.5
  %v196 = vmul.f32 %v190, 0.70710677
  %v197 = vmul.f32 %v192, 0.70710677
  %v198 = verf.f32.pop %v196
  %v199 = verf.f32.pop %v197
  %v200 = vadd.f32 %v198, 1.0
  %v201 = vadd.f32 %v199, 1.0
  %v202 = vmul.f32 %v194, %v200
  %v203 = vmul.f32 %v195, %v201
  %v204 = vld [vmem:[%s3] sm:$0xff]
  %v205 = vld [vmem:[%s3 + $0x8] sm:$0xff]
  %v206 = vld [vmem:[%s3 + $0x10] sm:$0xff]
  %v207 = vld [vmem:[%s3 + $0x18] sm:$0xff]
  %v208 = vld [vmem:[%s3 + $0x20] sm:$0xff]
  %v209 = vld [vmem:[%s3 + $0x28] sm:$0xff]
  %v210 = vld [vmem:[%s3 + $0x30] sm:$0xff]
  %v211 = vld [vmem:[%s3 + $0x38] sm:$0xff]
  %v212 = vld [vmem:[%s3 + $0x40] sm:$0xff]
  %v213 = vld [vmem:[%s3 + $0x48] sm:$0xff]
  %v214 = vld [vmem:[%s3 + $0x50] sm:$0xff]
  %v215 = vld [vmem:[%s3 + $0x58] sm:$0xff]
  %v216 = vld [vmem:[%s3 + $0x60] sm:$0xff]
  %v217 = vld [vmem:[%s3 + $0x68] sm:$0xff]
  %v218 = vld [vmem:[%s3 + $0x70] sm:$0xff]
  %v219 = vld [vmem:[%s3 + $0x78] sm:$0xff]
  %v220 = vld [vmem:[%s3 + $0x80] sm:$0xff]
  %v221 = vld [vmem:[%s3 + $0x88] sm:$0xff]
  %v222 = vld [vmem:[%s3 + $0x90] sm:$0xff]
  %v223 = vld [vmem:[%s3 + $0x98] sm:$0xff]
  %v224 = vld [vmem:[%s3 + $0xa0] sm:$0xff]
  %v225 = vld [vmem:[%s3 + $0xa8] sm:$0xff]
  %v226 = vld [vmem:[%s3 + $0xb0] sm:$0xff]
  %v227 = vld [vmem:[%s3 + $0xb8] sm:$0xff]
  %v228 = vld [vmem:[%s3 + $0xc0] sm:$0xff]
  %v229 = vld [vmem:[%s3 + $0xc8] sm:$0xff]
  %v230 = vld [vmem:[%s3 + $0xd0] sm:$0xff]
  %v231 = vld [vmem:[%s3 + $0xd8] sm:$0xff]
  %v232 = vld [vmem:[%s3 + $0xe0] sm:$0xff]
  %v233 = vld [vmem:[%s3 + $0xe8] sm:$0xff]
  %v234 = vld [vmem:[%s3 + $0xf0] sm:$0xff]
  %v235 = vld [vmem:[%s3 + $0xf8] sm:$0xff]
  %v236 = vld [vmem:[%s3 + $0x100] sm:$0xff]
  %v237 = vld [vmem:[%s3 + $0x108] sm:$0xff]
  %v238 = vld [vmem:[%s3 + $0x110] sm:$0xff]
  %v239 = vld [vmem:[%s3 + $0x118] sm:$0xff]
  %v240 = vld [vmem:[%s3 + $0x120] sm:$0xff]
  %v241 = vld [vmem:[%s3 + $0x128] sm:$0xff]
  %v242 = vld [vmem:[%s3 + $0x130] sm:$0xff]
  %v243 = vld [vmem:[%s3 + $0x138] sm:$0xff]
  %v244 = vld [vmem:[%s3 + $0x140] sm:$0xff]
  %v245 = vld [vmem:[%s3 + $0x148] sm:$0xff]
  %v246 = vld [vmem:[%s3 + $0x150] sm:$0xff]
  %v247 = vld [vmem:[%s3 + $0x158] sm:$0xff]
  %v248 = vld [vmem:[%s3 + $0x160] sm:$0xff]
  %v249 = vld [vmem:[%s3 + $0x168] sm:$0xff]
  %v250 = vld [vmem:[%s3 + $0x170] sm:$0xff]
  %v251 = vld [vmem:[%s3 + $0x178] sm:$0xff]
  %v252 = vld [vmem:[%s3 + $0x180] sm:$0xff]
  %v253 = vld [vmem:[%s3 + $0x188] sm:$0xff]
  %v254 = vld [vmem:[%s3 + $0x190] sm:$0xff]
  %v255 = vld [vmem:[%s3 + $0x198] sm:$0xff]
  %v256 = vld [vmem:[%s3 + $0x1a0] sm:$0xff]
  %v257 = vld [vmem:[%s3 + $0x1a8] sm:$0xff]
  %v258 = vld [vmem:[%s3 + $0x1b0] sm:$0xff]
  %v259 = vld [vmem:[%s3 + $0x1b8] sm:$0xff]
  %v260 = vld [vmem:[%s3 + $0x1c0] sm:$0xff]
  %v261 = vld [vmem:[%s3 + $0x1c8] sm:$0xff]
  %v262 = vld [vmem:[%s3 + $0x1d0] sm:$0xff]
  %v263 = vld [vmem:[%s3 + $0x1d8] sm:$0xff]
  %v264 = vld [vmem:[%s3 + $0x1e0] sm:$0xff]
  %v265 = vld [vmem:[%s3 + $0x1e8] sm:$0xff]
  %v266 = vld [vmem:[%s3 + $0x1f0] sm:$0xff]
  %v267 = vld [vmem:[%s3 + $0x1f8] sm:$0xff]
  %v269 = vlaneseq
  %v270 = vshrl.u32 %v269, 7
  %v271 = vsub.s32 0, %v270
  %v272 = vrot.slane %v33, %v271
  %v273 = vlaneseq
  %v274 = vshrl.u32 %v273, 7
  %v275 = vsub.s32 1, %v274
  %v276 = vrot.slane %v33, %v275
  %279 = vmatprep.subr.mxu0 %v205
  %280 = vmatpush1.msra.mxu0 %v204
  %281 = vmatprep.subr.mxu0 %v207
  %282 = vmatpush1.msra.mxu0 %v206
  %283 = vmatprep.subr.mxu0 %v209
  %284 = vmatpush1.msra.mxu0 %v208
  %285 = vmatprep.subr.mxu0 %v211
  %286 = vmatpush1.msra.mxu0 %v210
  %287 = vmatprep.subr.mxu0 %v213
  %288 = vmatpush1.msra.mxu0 %v212
  %289 = vmatprep.subr.mxu0 %v215
  %290 = vmatpush1.msra.mxu0 %v214
  %291 = vmatprep.subr.mxu0 %v217
  %292 = vmatpush1.msra.mxu0 %v216
  %293 = vmatprep.subr.mxu0 %v219
  %294 = vmatpush1.msra.mxu0 %v218
  %295 = vmatprep.subr.mxu0 %v221
  %296 = vmatpush1.msra.mxu0 %v220
  %297 = vmatprep.subr.mxu0 %v223
  %298 = vmatpush1.msra.mxu0 %v222
  %299 = vmatprep.subr.mxu0 %v225
  %300 = vmatpush1.msra.mxu0 %v224
  %301 = vmatprep.subr.mxu0 %v227
  %302 = vmatpush1.msra.mxu0 %v226
  %303 = vmatprep.subr.mxu0 %v229
  %304 = vmatpush1.msra.mxu0 %v228
  %305 = vmatprep.subr.mxu0 %v231
  %306 = vmatpush1.msra.mxu0 %v230
  %307 = vmatprep.subr.mxu0 %v233
  %308 = vmatpush1.msra.mxu0 %v232
  %309 = vmatprep.subr.mxu0 %v235
  %310 = vmatpush1.msra.mxu0 %v234
  %311 = vmatprep.subr.mxu0 %v237
  %312 = vmatpush1.msra.mxu0 %v236
  %313 = vmatprep.subr.mxu0 %v239
  %314 = vmatpush1.msra.mxu0 %v238
  %315 = vmatprep.subr.mxu0 %v241
  %316 = vmatpush1.msra.mxu0 %v240
  %317 = vmatprep.subr.mxu0 %v243
  %318 = vmatpush1.msra.mxu0 %v242
  %319 = vmatprep.subr.mxu0 %v245
  %320 = vmatpush1.msra.mxu0 %v244
  %321 = vmatprep.subr.mxu0 %v247
  %322 = vmatpush1.msra.mxu0 %v246
  %323 = vmatprep.subr.mxu0 %v249
  %324 = vmatpush1.msra.mxu0 %v248
  %325 = vmatprep.subr.mxu0 %v251
  %326 = vmatpush1.msra.mxu0 %v250
  %327 = vmatprep.subr.mxu0 %v253
  %328 = vmatpush1.msra.mxu0 %v252
  %329 = vmatprep.subr.mxu0 %v255
  %330 = vmatpush1.msra.mxu0 %v254
  %331 = vmatprep.subr.mxu0 %v257
  %332 = vmatpush1.msra.mxu0 %v256
  %333 = vmatprep.subr.mxu0 %v259
  %334 = vmatpush1.msra.mxu0 %v258
  %335 = vmatprep.subr.mxu0 %v261
  %336 = vmatpush1.msra.mxu0 %v260
  %337 = vmatprep.subr.mxu0 %v263
  %338 = vmatpush1.msra.mxu0 %v262
  %339 = vmatprep.subr.mxu0 %v265
  %340 = vmatpush1.msra.mxu0 %v264
  %341 = vmatprep.subr.mxu0 %v267
  %342 = vmatpush1.msra.mxu0 %v266
  %343 = vmatprep.mubr.f32.mxu0 %v203
  %344 = vmatmul.mubr.f32.gmra.mrb[0].mxu0 %v202
  %v345 = vpop.f32.mrb[0].mxu0
  %v346 = vadd.f32 %v272, %v345
  %v347 = vpop.f32.mrb[0].mxu0
  %v348 = vadd.f32 %v276, %v347
  %349 = vdwg.mxu0
  %v350 = vmul.f32 %v346, 0.5
  %v351 = vmul.f32 %v348, 0.5
  %v352 = vmul.f32 %v346, 0.70710677
  %v353 = vmul.f32 %v348, 0.70710677
  %v354 = verf.f32.pop %v352
  %v355 = verf.f32.pop %v353
  %v356 = vadd.f32 %v354, 1.0
  %v357 = vadd.f32 %v355, 1.0
  %v358 = vmul.f32 %v350, %v356
  %v359 = vmul.f32 %v351, %v357
  %v360 = vld [vmem:[%s5] sm:$0xff]
  %v361 = vld [vmem:[%s5 + $0x8] sm:$0xff]
  %v362 = vld [vmem:[%s5 + $0x10] sm:$0xff]
  %v363 = vld [vmem:[%s5 + $0x18] sm:$0xff]
  %v364 = vld [vmem:[%s5 + $0x20] sm:$0xff]
  %v365 = vld [vmem:[%s5 + $0x28] sm:$0xff]
  %v366 = vld [vmem:[%s5 + $0x30] sm:$0xff]
  %v367 = vld [vmem:[%s5 + $0x38] sm:$0xff]
  %v368 = vld [vmem:[%s5 + $0x40] sm:$0xff]
  %v369 = vld [vmem:[%s5 + $0x48] sm:$0xff]
  %v370 = vld [vmem:[%s5 + $0x50] sm:$0xff]
  %v371 = vld [vmem:[%s5 + $0x58] sm:$0xff]
  %v372 = vld [vmem:[%s5 + $0x60] sm:$0xff]
  %v373 = vld [vmem:[%s5 + $0x68] sm:$0xff]
  %v374 = vld [vmem:[%s5 + $0x70] sm:$0xff]
  %v375 = vld [vmem:[%s5 + $0x78] sm:$0xff]
  %v376 = vld [vmem:[%s5 + $0x80] sm:$0xff]
  %v377 = vld [vmem:[%s5 + $0x88] sm:$0xff]
  %v378 = vld [vmem:[%s5 + $0x90] sm:$0xff]
  %v379 = vld [vmem:[%s5 + $0x98] sm:$0xff]
  %v380 = vld [vmem:[%s5 + $0xa0] sm:$0xff]
  %v381 = vld [vmem:[%s5 + $0xa8] sm:$0xff]
  %v382 = vld [vmem:[%s5 + $0xb0] sm:$0xff]
  %v383 = vld [vmem:[%s5 + $0xb8] sm:$0xff]
  %v384 = vld [vmem:[%s5 + $0xc0] sm:$0xff]
  %v385 = vld [vmem:[%s5 + $0xc8] sm:$0xff]
  %v386 = vld [vmem:[%s5 + $0xd0] sm:$0xff]
  %v387 = vld [vmem:[%s5 + $0xd8] sm:$0xff]
  %v388 = vld [vmem:[%s5 + $0xe0] sm:$0xff]
  %v389 = vld [vmem:[%s5 + $0xe8] sm:$0xff]
  %v390 = vld [vmem:[%s5 + $0xf0] sm:$0xff]
  %v391 = vld [vmem:[%s5 + $0xf8] sm:$0xff]
  %v392 = vld [vmem:[%s5 + $0x100] sm:$0xff]
  %v393 = vld [vmem:[%s5 + $0x108] sm:$0xff]
  %v394 = vld [vmem:[%s5 + $0x110] sm:$0xff]
  %v395 = vld [vmem:[%s5 + $0x118] sm:$0xff]
  %v396 = vld [vmem:[%s5 + $0x120] sm:$0xff]
  %v397 = vld [vmem:[%s5 + $0x128] sm:$0xff]
  %v398 = vld [vmem:[%s5 + $0x130] sm:$0xff]
  %v399 = vld [vmem:[%s5 + $0x138] sm:$0xff]
  %v400 = vld [vmem:[%s5 + $0x140] sm:$0xff]
  %v401 = vld [vmem:[%s5 + $0x148] sm:$0xff]
  %v402 = vld [vmem:[%s5 + $0x150] sm:$0xff]
  %v403 = vld [vmem:[%s5 + $0x158] sm:$0xff]
  %v404 = vld [vmem:[%s5 + $0x160] sm:$0xff]
  %v405 = vld [vmem:[%s5 + $0x168] sm:$0xff]
  %v406 = vld [vmem:[%s5 + $0x170] sm:$0xff]
  %v407 = vld [vmem:[%s5 + $0x178] sm:$0xff]
  %v408 = vld [vmem:[%s5 + $0x180] sm:$0xff]
  %v409 = vld [vmem:[%s5 + $0x188] sm:$0xff]
  %v410 = vld [vmem:[%s5 + $0x190] sm:$0xff]
  %v411 = vld [vmem:[%s5 + $0x198] sm:$0xff]
  %v412 = vld [vmem:[%s5 + $0x1a0] sm:$0xff]
  %v413 = vld [vmem:[%s5 + $0x1a8] sm:$0xff]
  %v414 = vld [vmem:[%s5 + $0x1b0] sm:$0xff]
  %v415 = vld [vmem:[%s5 + $0x1b8] sm:$0xff]
  %v416 = vld [vmem:[%s5 + $0x1c0] sm:$0xff]
  %v417 = vld [vmem:[%s5 + $0x1c8] sm:$0xff]
  %v418 = vld [vmem:[%s5 + $0x1d0] sm:$0xff]
  %v419 = vld [vmem:[%s5 + $0x1d8] sm:$0xff]
  %v420 = vld [vmem:[%s5 + $0x1e0] sm:$0xff]
  %v421 = vld [vmem:[%s5 + $0x1e8] sm:$0xff]
  %v422 = vld [vmem:[%s5 + $0x1f0] sm:$0xff]
  %v423 = vld [vmem:[%s5 + $0x1f8] sm:$0xff]
  %v425 = vlaneseq
  %v426 = vshrl.u32 %v425, 7
  %v427 = vsub.s32 0, %v426
  %v428 = vrot.slane %v34, %v427
  %v429 = vlaneseq
  %v430 = vshrl.u32 %v429, 7
  %v431 = vsub.s32 1, %v430
  %v432 = vrot.slane %v34, %v431
  %435 = vmatprep.subr.mxu0 %v361
  %436 = vmatpush1.msra.mxu0 %v360
  %437 = vmatprep.subr.mxu0 %v363
  %438 = vmatpush1.msra.mxu0 %v362
  %439 = vmatprep.subr.mxu0 %v365
  %440 = vmatpush1.msra.mxu0 %v364
  %441 = vmatprep.subr.mxu0 %v367
  %442 = vmatpush1.msra.mxu0 %v366
  %443 = vmatprep.subr.mxu0 %v369
  %444 = vmatpush1.msra.mxu0 %v368
  %445 = vmatprep.subr.mxu0 %v371
  %446 = vmatpush1.msra.mxu0 %v370
  %447 = vmatprep.subr.mxu0 %v373
  %448 = vmatpush1.msra.mxu0 %v372
  %449 = vmatprep.subr.mxu0 %v375
  %450 = vmatpush1.msra.mxu0 %v374
  %451 = vmatprep.subr.mxu0 %v377
  %452 = vmatpush1.msra.mxu0 %v376
  %453 = vmatprep.subr.mxu0 %v379
  %454 = vmatpush1.msra.mxu0 %v378
  %455 = vmatprep.subr.mxu0 %v381
  %456 = vmatpush1.msra.mxu0 %v380
  %457 = vmatprep.subr.mxu0 %v383
  %458 = vmatpush1.msra.mxu0 %v382
  %459 = vmatprep.subr.mxu0 %v385
  %460 = vmatpush1.msra.mxu0 %v384
  %461 = vmatprep.subr.mxu0 %v387
  %462 = vmatpush1.msra.mxu0 %v386
  %463 = vmatprep.subr.mxu0 %v389
  %464 = vmatpush1.msra.mxu0 %v388
  %465 = vmatprep.subr.mxu0 %v391
  %466 = vmatpush1.msra.mxu0 %v390
  %467 = vmatprep.subr.mxu0 %v393
  %468 = vmatpush1.msra.mxu0 %v392
  %469 = vmatprep.subr.mxu0 %v395
  %470 = vmatpush1.msra.mxu0 %v394
  %471 = vmatprep.subr.mxu0 %v397
  %472 = vmatpush1.msra.mxu0 %v396
  %473 = vmatprep.subr.mxu0 %v399
  %474 = vmatpush1.msra.mxu0 %v398
  %475 = vmatprep.subr.mxu0 %v401
  %476 = vmatpush1.msra.mxu0 %v400
  %477 = vmatprep.subr.mxu0 %v403
  %478 = vmatpush1.msra.mxu0 %v402
  %479 = vmatprep.subr.mxu0 %v405
  %480 = vmatpush1.msra.mxu0 %v404
  %481 = vmatprep.subr.mxu0 %v407
  %482 = vmatpush1.msra.mxu0 %v406
  %483 = vmatprep.subr.mxu0 %v409
  %484 = vmatpush1.msra.mxu0 %v408
  %485 = vmatprep.subr.mxu0 %v411
  %486 = vmatpush1.msra.mxu0 %v410
  %487 = vmatprep.subr.mxu0 %v413
  %488 = vmatpush1.msra.mxu0 %v412
  %489 = vmatprep.subr.mxu0 %v415
  %490 = vmatpush1.msra.mxu0 %v414
  %491 = vmatprep.subr.mxu0 %v417
  %492 = vmatpush1.msra.mxu0 %v416
  %493 = vmatprep.subr.mxu0 %v419
  %494 = vmatpush1.msra.mxu0 %v418
  %495 = vmatprep.subr.mxu0 %v421
  %496 = vmatpush1.msra.mxu0 %v420
  %497 = vmatprep.subr.mxu0 %v423
  %498 = vmatpush1.msra.mxu0 %v422
  %499 = vmatprep.mubr.f32.mxu0 %v359
  %500 = vmatmul.mubr.f32.gmra.mrb[0].mxu0 %v358
  %v501 = vpop.f32.mrb[0].mxu0
  %v502 = vadd.f32 %v428, %v501
  %v503 = vpop.f32.mrb[0].mxu0
  %v504 = vadd.f32 %v432, %v503
  %505 = vdwg.mxu0
  %v506 = vmul.f32 %v502, 0.5
  %v507 = vmul.f32 %v504, 0.5
  %v508 = vmul.f32 %v502, 0.70710677
  %v509 = vmul.f32 %v504, 0.70710677
  %v510 = verf.f32.pop %v508
  %v511 = verf.f32.pop %v509
  %v512 = vadd.f32 %v510, 1.0
  %v513 = vadd.f32 %v511, 1.0
  %v514 = vmul.f32 %v506, %v512
  %v515 = vmul.f32 %v507, %v513
  %v516 = vld [vmem:[%s7] sm:$0xff]
  %v517 = vld [vmem:[%s7 + $0x8] sm:$0xff]
  %v518 = vld [vmem:[%s7 + $0x10] sm:$0xff]
  %v519 = vld [vmem:[%s7 + $0x18] sm:$0xff]
  %v520 = vld [vmem:[%s7 + $0x20] sm:$0xff]
  %v521 = vld [vmem:[%s7 + $0x28] sm:$0xff]
  %v522 = vld [vmem:[%s7 + $0x30] sm:$0xff]
  %v523 = vld [vmem:[%s7 + $0x38] sm:$0xff]
  %v524 = vld [vmem:[%s7 + $0x40] sm:$0xff]
  %v525 = vld [vmem:[%s7 + $0x48] sm:$0xff]
  %v526 = vld [vmem:[%s7 + $0x50] sm:$0xff]
  %v527 = vld [vmem:[%s7 + $0x58] sm:$0xff]
  %v528 = vld [vmem:[%s7 + $0x60] sm:$0xff]
  %v529 = vld [vmem:[%s7 + $0x68] sm:$0xff]
  %v530 = vld [vmem:[%s7 + $0x70] sm:$0xff]
  %v531 = vld [vmem:[%s7 + $0x78] sm:$0xff]
  %v532 = vld [vmem:[%s7 + $0x80] sm:$0xff]
  %v533 = vld [vmem:[%s7 + $0x88] sm:$0xff]
  %v534 = vld [vmem:[%s7 + $0x90] sm:$0xff]
  %v535 = vld [vmem:[%s7 + $0x98] sm:$0xff]
  %v536 = vld [vmem:[%s7 + $0xa0] sm:$0xff]
  %v537 = vld [vmem:[%s7 + $0xa8] sm:$0xff]
  %v538 = vld [vmem:[%s7 + $0xb0] sm:$0xff]
  %v539 = vld [vmem:[%s7 + $0xb8] sm:$0xff]
  %v540 = vld [vmem:[%s7 + $0xc0] sm:$0xff]
  %v541 = vld [vmem:[%s7 + $0xc8] sm:$0xff]
  %v542 = vld [vmem:[%s7 + $0xd0] sm:$0xff]
  %v543 = vld [vmem:[%s7 + $0xd8] sm:$0xff]
  %v544 = vld [vmem:[%s7 + $0xe0] sm:$0xff]
  %v545 = vld [vmem:[%s7 + $0xe8] sm:$0xff]
  %v546 = vld [vmem:[%s7 + $0xf0] sm:$0xff]
  %v547 = vld [vmem:[%s7 + $0xf8] sm:$0xff]
  %548 = vmatprep.subr.mxu0 0.0
  %549 = vmatpush1.msra.mxu0 %v516
  %550 = vmatprep.subr.mxu0 0.0
  %551 = vmatpush1.msra.mxu0 %v517
  %552 = vmatprep.subr.mxu0 0.0
  %553 = vmatpush1.msra.mxu0 %v518
  %554 = vmatprep.subr.mxu0 0.0
  %555 = vmatpush1.msra.mxu0 %v519
  %556 = vmatprep.subr.mxu0 0.0
  %557 = vmatpush1.msra.mxu0 %v520
  %558 = vmatprep.subr.mxu0 0.0
  %559 = vmatpush1.msra.mxu0 %v521
  %560 = vmatprep.subr.mxu0 0.0
  %561 = vmatpush1.msra.mxu0 %v522
  %562 = vmatprep.subr.mxu0 0.0
  %563 = vmatpush1.msra.mxu0 %v523
  %564 = vmatprep.subr.mxu0 0.0
  %565 = vmatpush1.msra.mxu0 %v524
  %566 = vmatprep.subr.mxu0 0.0
  %567 = vmatpush1.msra.mxu0 %v525
  %568 = vmatprep.subr.mxu0 0.0
  %569 = vmatpush1.msra.mxu0 %v526
  %570 = vmatprep.subr.mxu0 0.0
  %571 = vmatpush1.msra.mxu0 %v527
  %572 = vmatprep.subr.mxu0 0.0
  %573 = vmatpush1.msra.mxu0 %v528
  %574 = vmatprep.subr.mxu0 0.0
  %575 = vmatpush1.msra.mxu0 %v529
  %576 = vmatprep.subr.mxu0 0.0
  %577 = vmatpush1.msra.mxu0 %v530
  %578 = vmatprep.subr.mxu0 0.0
  %579 = vmatpush1.msra.mxu0 %v531
  %580 = vmatprep.subr.mxu0 0.0
  %581 = vmatpush1.msra.mxu0 %v532
  %582 = vmatprep.subr.mxu0 0.0
  %583 = vmatpush1.msra.mxu0 %v533
  %584 = vmatprep.subr.mxu0 0.0
  %585 = vmatpush1.msra.mxu0 %v534
  %586 = vmatprep.subr.mxu0 0.0
  %587 = vmatpush1.msra.mxu0 %v535
  %588 = vmatprep.subr.mxu0 0.0
  %589 = vmatpush1.msra.mxu0 %v536
  %590 = vmatprep.subr.mxu0 0.0
  %591 = vmatpush1.msra.mxu0 %v537
  %592 = vmatprep.subr.mxu0 0.0
  %593 = vmatpush1.msra.mxu0 %v538
  %594 = vmatprep.subr.mxu0 0.0
  %595 = vmatpush1.msra.mxu0 %v539
  %596 = vmatprep.subr.mxu0 0.0
  %597 = vmatpush1.msra.mxu0 %v540
  %598 = vmatprep.subr.mxu0 0.0
  %599 = vmatpush1.msra.mxu0 %v541
  %600 = vmatprep.subr.mxu0 0.0
  %601 = vmatpush1.msra.mxu0 %v542
  %602 = vmatprep.subr.mxu0 0.0
  %603 = vmatpush1.msra.mxu0 %v543
  %604 = vmatprep.subr.mxu0 0.0
  %605 = vmatpush1.msra.mxu0 %v544
  %606 = vmatprep.subr.mxu0 0.0
  %607 = vmatpush1.msra.mxu0 %v545
  %608 = vmatprep.subr.mxu0 0.0
  %609 = vmatpush1.msra.mxu0 %v546
  %610 = vmatprep.subr.mxu0 0.0
  %611 = vmatpush1.msra.mxu0 %v547
  %612 = vmatprep.mubr.f32.mxu0 %v515
  %613 = vmatmul.mubr.f32.gmra.mrb[0].mxu0 %v514
  %v614 = vpop.f32.mrb[0].mxu0
  %v615 = vadd.f32 %v35, %v614
  %v616 = vpop.f32.mrb[0].mxu0
  %617 = vdwg.mxu0
  %v618 = vxor.u32 %v615, 2147483648
  %v619 = vmul.f32 %v618, 1.442695
  %v620 = vpow.pop %v619
  %v621 = vadd.f32 %v620, 1.0
  %v622 = vrcp.pop %v621
  %v623 = vmul.f32 1.0, %v622
  %624 = vst [vmem:[%s9] sm:$0x1] %v623
  // Predicated region
  $region38: #{ltam_controller_v1.1} parent=0 // pred_check
    _
  $region39: #{ltam_controller_v1.1} parent=0 // pred_check_branch
    %626 = sbr.rel (0) target = $region41
  $region40: #{ltam_controller_v1.1} parent=0 // pred_region
    _
  $region41: #{ltam_controller_v1.1} parent=0 // pred_fallthru
    _
  // Predicated region
  $region42: #{ltam_controller_v1.1} parent=0 // pred_check
    _
  $region43: #{ltam_controller_v1.1} parent=0 // pred_check_branch
    %628 = sbr.rel (0) target = $region45
  $region44: #{ltam_controller_v1.1} parent=0 // pred_region
    _
  $region45: #{ltam_controller_v1.1} parent=0 // pred_fallthru
    _

</llo_original>
